<compile_context>
chip_gen: v7x
topology: tpu7x:2x2x1
jax: 0.10.0
libtpu: 0.0.40
codegen_flags: <defaults>
</compile_context>

<pallas_src>
import functools

import jax
import jax.numpy as jnp
from jax.experimental import pallas as pl
from jax.experimental.pallas import tpu as pltpu


def _round_up(x, m):
    return (x + m - 1) // m * m


def _memcodes_kernel(x_ref, kt_ref, v_ref,            # inputs
                     out_ref, idx_ref, counts_ref,    # outputs
                     *, tm, m_real, m_pad, num_overlaps, codebook_size):
    i = pl.program_id(0)                    # token-tile index ("parallel")
    O, S = num_overlaps, codebook_size

    # ---- one wide MXU matmul: logits for ALL overlaps at once --------------
    q = x_ref[...].astype(jnp.bfloat16)                               # (TM, D)
    logits = jnp.dot(q, kt_ref[...],
                     preferred_element_type=jnp.float32)              # (TM, O*S)
    TM, OS = logits.shape

    lane = jax.lax.broadcasted_iota(jnp.int32, (TM, OS), 1)           # global lane ids
    code = jax.lax.broadcasted_iota(jnp.int32, (TM, S), 1)            # per-overlap codes
    lane_o = jax.lax.broadcasted_iota(jnp.int32, (TM, O), 1)

    # ---- per-overlap argmax on lane slices (static unroll, O is small) -----
    onehot = None                                                     # (TM, O*S) bool
    idx_mat = jnp.zeros((TM, O), jnp.int32)
    for o in range(O):
        sl = logits[:, o * S:(o + 1) * S]                             # (TM, S)
        mx = jnp.max(sl, axis=-1, keepdims=True)                      # (TM, 1)
        # first occurrence on ties, like torch.argmax
        idx = jnp.min(jnp.where(sl == mx, code, S),
                      axis=-1, keepdims=True)                         # (TM, 1)
        idx_mat = jnp.where(lane_o == o, idx, idx_mat)
        hit = lane == (idx + o * S)                                   # one 1 per row
        onehot = hit if onehot is None else jnp.logical_or(onehot, hit)

    # ---- second matmul: one-hot (O ones/row) @ stacked V == sum over overlaps
    out_ref[...] = jnp.dot(onehot.astype(jnp.bfloat16), v_ref[...],
                           preferred_element_type=jnp.float32).astype(out_ref.dtype)

    # ---- indices: lane-dense (O, TM) block, written once per tile ----------
    idx_ref[...] = idx_mat.T                                          # (O, TM) int32

    # ---- per-tile one-hot counts for perplexity ----------------------------
    oh = onehot.astype(jnp.float32)
    if m_pad != m_real:                      # masking only compiled in if padded
        row = jax.lax.broadcasted_iota(jnp.int32, (TM, 1), 0)
        oh = jnp.where((i * tm + row) < m_real, oh, 0.0)
    counts_ref[...] = jnp.sum(oh, axis=0, keepdims=True)              # (1, O*S)


def mq_forward(x, params, *, tile_m=512):
    """Fused MQ forward. x: (B, N, D).  params: list of (codebook, Wk, Wv).

    Returns (out, info):
      out: (B, N, D) = sum over overlaps of each head's quantized embedding
      info['indices']: (B, N, O) int32
      info['perplexity']: list of O arrays of shape (1,)
    """
    B, N, D = x.shape
    O = len(params)
    S = params[0][0].shape[0]
    OS = O * S
    scale = float(D) ** (-0.5)

    # Codebook projections are tiny (S x D): compute them once outside the
    # kernel, fold the query scale into k, pre-transpose and stack k -> (D, O*S),
    # stack v -> (O*S, D), cast both to bf16 (MXU operands, VMEM-resident).
    kts, vs = [], []
    for cb, wk, wv in params:
        k = jnp.dot(cb.astype(jnp.float32), wk.astype(jnp.float32))   # (S, D)
        v = jnp.dot(cb.astype(jnp.float32), wv.astype(jnp.float32))   # (S, D)
        kts.append((k * scale).T)                                     # (D, S)
        vs.append(v)
    kt = jnp.concatenate(kts, axis=1).astype(jnp.bfloat16)            # (D, O*S)
    vv = jnp.concatenate(vs, axis=0).astype(jnp.bfloat16)             # (O*S, D)

    M = B * N
    if M <= tile_m:
        TM = _round_up(M, 8)          # single full-array tile
        M_pad = TM
    else:
        TM = _round_up(tile_m, 128)   # keep the token tile 128-lane aligned
        M_pad = _round_up(M, TM)
    MT = M_pad // TM

    x2 = x.reshape(M, D)
    if M_pad != M:
        x2 = jnp.pad(x2, ((0, M_pad - M), (0, 0)))

    out_dtype = x.dtype
    itm_x = x2.dtype.itemsize
    itm_o = jnp.dtype(out_dtype).itemsize

    kernel = functools.partial(_memcodes_kernel, tm=TM, m_real=M, m_pad=M_pad,
                               num_overlaps=O, codebook_size=S)

    # Explicit scoped-VMEM budget: double-buffered x/out/idx/counts blocks,
    # single-buffered kt/vv tables, plus headroom for (TM, O*S) f32 temporaries.
    vmem_bytes = (2 * TM * D * itm_x            # x blocks
                  + 2 * TM * D * itm_o          # out blocks
                  + 2 * O * TM * 4              # idx blocks
                  + 2 * OS * 4                  # counts blocks
                  + 2 * D * OS * 2              # kt + vv (bf16, single-buffered)
                  + 4 * TM * OS * 4)            # logits / one-hot / iota temps
    vmem_limit = int(min(max(2 * vmem_bytes, 32 * 1024 * 1024), 64 * 1024 * 1024))

    flops = 4 * M_pad * OS * D                  # two fused matmuls per tile
    bytes_accessed = (M_pad * D * itm_x         # x read once per tile
                      + 2 * OS * D * 2          # kt + vv (bf16), resident
                      + M_pad * D * itm_o       # out
                      + M_pad * O * 4           # indices
                      + MT * OS * 4)            # per-tile counts

    out2, idx2, counts = pl.pallas_call(
        kernel,
        grid=(MT,),
        in_specs=[
            pl.BlockSpec((TM, D), lambda i: (i, 0)),
            # constant tables: single-buffered, VMEM-resident for the whole grid
            pl.BlockSpec((D, OS), lambda i: (0, 0), pipeline_mode=pl.Buffered(1)),
            pl.BlockSpec((OS, D), lambda i: (0, 0), pipeline_mode=pl.Buffered(1)),
        ],
        out_specs=[
            pl.BlockSpec((TM, D), lambda i: (i, 0)),
            pl.BlockSpec((O, TM), lambda i: (0, i)),         # lane-dense indices
            pl.BlockSpec((None, 1, OS), lambda i: (i, 0, 0)),
        ],
        out_shape=(
            jax.ShapeDtypeStruct((M_pad, D), out_dtype),
            jax.ShapeDtypeStruct((O, M_pad), jnp.int32),
            jax.ShapeDtypeStruct((MT, 1, OS), jnp.float32),
        ),
        compiler_params=pltpu.CompilerParams(
            dimension_semantics=("parallel",),
            vmem_limit_bytes=vmem_limit),
        cost_estimate=pl.CostEstimate(
            flops=int(flops), transcendentals=0,
            bytes_accessed=int(bytes_accessed)),
    )(x2, kt, vv)

    out = out2[:M].reshape(B, N, D)
    indices = idx2[:, :M].T.reshape(B, N, O)                 # back to (B, N, O)

    # Tiny finalize outside the kernel (keeps the token axis "parallel").
    mean = counts.reshape(MT, O, S).sum(axis=0) / jnp.float32(M)        # (O, S)
    perp = jnp.exp(-jnp.sum(mean * jnp.log(mean + 1e-10), axis=-1))     # (O,)

    info = dict(indices=indices,
                perplexity=[perp[j:j + 1] for j in range(O)])
    return out, info


def memcodes_forward(x, codebook, wk, wv, *, tile_m=512):
    """Single Memcodes head (API parity with the torch module's forward)."""
    out, info = mq_forward(x, [(codebook, wk, wv)], tile_m=tile_m)
    return out, dict(indices=info["indices"][..., 0],
                     perplexity=info["perplexity"][0])


def init_mq_params(key, features, codebook_size, num_overlaps):
    params = []
    for i in range(num_overlaps):
        k_cb, k_wk, k_wv, key = jax.random.split(jax.random.fold_in(key, i), 4)
        codebook = jax.random.normal(k_cb, (codebook_size, features), jnp.float32)
        wk = jax.random.normal(k_wk, (features, features), jnp.float32) * (features ** -0.5)
        wv = jax.random.normal(k_wv, (features, features), jnp.float32) * (features ** -0.5)
        params.append((codebook, wk, wv))
    return params


def mq_forward_reference(x, params):
    """Pure-JAX reference (same bf16 matmul operands / f32 accumulation)."""
    B, N, D = x.shape
    scale = float(D) ** (-0.5)
    q = x.reshape(B * N, D).astype(jnp.bfloat16)
    outs, idxs, perps = [], [], []
    for cb, wk, wv in params:
        k = jnp.dot(cb, wk)
        v = jnp.dot(cb, wv)
        kt = ((k * scale).T).astype(jnp.bfloat16)
        logits = jnp.dot(q, kt, preferred_element_type=jnp.float32)
        idx = jnp.argmax(logits, axis=-1)
        onehot = jax.nn.one_hot(idx, cb.shape[0], dtype=jnp.float32)
        out = jnp.dot(onehot.astype(jnp.bfloat16), v.astype(jnp.bfloat16),
                      preferred_element_type=jnp.float32)
        mean = jnp.mean(onehot, axis=0)
        perps.append(jnp.exp(-jnp.sum(mean * jnp.log(mean + 1e-10))))
        outs.append(out)
        idxs.append(idx)
    out = sum(outs).reshape(B, N, D).astype(x.dtype)
    indices = jnp.stack(idxs, axis=-1).reshape(B, N, len(params)).astype(jnp.int32)
    return out, indices, jnp.stack(perps)


if __name__ == "__main__":
    features = 32
    codebook_size = 16
    num_overlaps = 2
    B, N = 2, 8

    key = jax.random.PRNGKey(0)
    key_x, key_p = jax.random.split(key)
    x = jax.random.normal(key_x, (B, N, features), jnp.float32)
    params = init_mq_params(key_p, features, codebook_size, num_overlaps)

    out, info = jax.jit(mq_forward)(x, params)
    jax.block_until_ready(out)
    jax.block_until_ready(info["indices"])
    jax.block_until_ready(info["perplexity"])

    assert out.shape == (B, N, features)
    assert info["indices"].shape == (B, N, num_overlaps)
    assert len(info["perplexity"]) == num_overlaps

    # Correctness check against a pure-JAX reference using the same bf16 math.
    ref_out, ref_idx, ref_perp = mq_forward_reference(x, params)
    assert jnp.allclose(out, ref_out, atol=1e-2, rtol=1e-2), "out mismatch"
    assert bool((info["indices"] == ref_idx).all()), "indices mismatch"
    perp_kernel = jnp.concatenate(info["perplexity"])
    assert jnp.allclose(perp_kernel, ref_perp, atol=1e-3, rtol=1e-3), "perplexity mismatch"

    print("KERNEL_OK")
</pallas_src>

<mosaic_0001>
module attributes {stable_mosaic.version = 11 : i64} {
  func.func @_memcodes_kernel(%arg0: i32, %arg1: memref<16x32xf32, #tpu.memory_space<vmem>>, %arg2: memref<32x32xbf16, #tpu.memory_space<vmem>>, %arg3: memref<32x32xbf16, #tpu.memory_space<vmem>>, %arg4: memref<16x32xf32, #tpu.memory_space<vmem>>, %arg5: memref<2x16xi32, #tpu.memory_space<vmem>>, %arg6: memref<1x1x32xf32, #tpu.memory_space<vmem>>) attributes {dimension_semantics = [#tpu.dimension_semantics<parallel>], iteration_bounds = array<i64: 1>, scalar_prefetch = 0 : i64, scratch_operands = 0 : i64, tpu.core_type = #tpu.core_type<tc>, window_params = [{transform_indices = @transform_0, window_bounds = array<i64: 16, 32>}, {pipeline_mode = #tpu.pipeline_mode<synchronous>, transform_indices = @transform_1, window_bounds = array<i64: 32, 32>}, {pipeline_mode = #tpu.pipeline_mode<synchronous>, transform_indices = @transform_2, window_bounds = array<i64: 32, 32>}, {transform_indices = @transform_3, window_bounds = array<i64: 16, 32>}, {transform_indices = @transform_4, window_bounds = array<i64: 2, 16>}, {transform_indices = @transform_5, window_bounds = array<i64: 1, 1, 32>}]} {
    %c0 = arith.constant 0 : index
    %c0_0 = arith.constant 0 : index
    %0 = vector.load %arg1[%c0, %c0_0] : memref<16x32xf32, #tpu.memory_space<vmem>>, vector<16x32xf32>
    %1 = arith.truncf %0 : vector<16x32xf32> to vector<16x32xbf16>
    %c0_1 = arith.constant 0 : index
    %c0_2 = arith.constant 0 : index
    %2 = vector.load %arg2[%c0_1, %c0_2] : memref<32x32xbf16, #tpu.memory_space<vmem>>, vector<32x32xbf16>
    %cst = arith.constant dense<0.000000e+00> : vector<16x32xf32>
    %3 = tpu.matmul %1, %2, %cst {dimension_numbers = #tpu.dot_dimension_numbers<[1], [0], [0], [1], [0, 0, 1, 1], [], []>} : vector<16x32xbf16>, vector<32x32xbf16>, vector<16x32xf32> -> vector<16x32xf32>
    %4 = tpu.iota {dimensions = array<i32: 1>} : vector<16x32xi32>
    %5 = tpu.iota {dimensions = array<i32: 1>} : vector<16x16xi32>
    %6 = tpu.iota {dimensions = array<i32: 1>} : vector<16x2xi32>
    %c0_i32 = arith.constant 0 : i32
    %7 = vector.broadcast %c0_i32 : i32 to vector<16x2xi32>
    %8 = vector.extract_strided_slice %3 {offsets = [0, 0], sizes = [16, 16], strides = [1, 1]} : vector<16x32xf32> to vector<16x16xf32>
    %cst_3 = arith.constant dense<0xFF800000> : vector<16xf32>
    %9 = vector.multi_reduction <maximumf>, %8, %cst_3 [1] : vector<16x16xf32> to vector<16xf32>
    %10 = vector.shape_cast %9 : vector<16xf32> to vector<16x1xf32>
    %11 = vector.broadcast %10 : vector<16x1xf32> to vector<16x16xf32>
    %12 = arith.cmpf oeq, %8, %11 : vector<16x16xf32>
    %c16_i32 = arith.constant 16 : i32
    %13 = vector.broadcast %c16_i32 : i32 to vector<16x16xi32>
    %14 = arith.select %12, %5, %13 : vector<16x16xi1>, vector<16x16xi32>
    %cst_4 = arith.constant dense<2147483647> : vector<16xi32>
    %15 = vector.multi_reduction <minsi>, %14, %cst_4 [1] : vector<16x16xi32> to vector<16xi32>
    %16 = vector.shape_cast %15 : vector<16xi32> to vector<16x1xi32>
    %c0_i32_5 = arith.constant 0 : i32
    %17 = vector.broadcast %c0_i32_5 : i32 to vector<16x2xi32>
    %18 = arith.cmpi eq, %6, %17 : vector<16x2xi32>
    %19 = vector.shape_cast %16 : vector<16x1xi32> to vector<16x1xi32>
    %20 = vector.broadcast %19 : vector<16x1xi32> to vector<16x2xi32>
    %21 = arith.select %18, %20, %7 : vector<16x2xi1>, vector<16x2xi32>
    %c0_i32_6 = arith.constant 0 : i32
    %22 = vector.broadcast %c0_i32_6 : i32 to vector<16x1xi32>
    %23 = arith.addi %16, %22 : vector<16x1xi32>
    %24 = vector.broadcast %23 : vector<16x1xi32> to vector<16x32xi32>
    %25 = arith.cmpi eq, %4, %24 : vector<16x32xi32>
    %26 = vector.extract_strided_slice %3 {offsets = [0, 16], sizes = [16, 16], strides = [1, 1]} : vector<16x32xf32> to vector<16x16xf32>
    %cst_7 = arith.constant dense<0xFF800000> : vector<16xf32>
    %27 = vector.multi_reduction <maximumf>, %26, %cst_7 [1] : vector<16x16xf32> to vector<16xf32>
    %28 = vector.shape_cast %27 : vector<16xf32> to vector<16x1xf32>
    %29 = vector.broadcast %28 : vector<16x1xf32> to vector<16x16xf32>
    %30 = arith.cmpf oeq, %26, %29 : vector<16x16xf32>
    %c16_i32_8 = arith.constant 16 : i32
    %31 = vector.broadcast %c16_i32_8 : i32 to vector<16x16xi32>
    %32 = arith.select %30, %5, %31 : vector<16x16xi1>, vector<16x16xi32>
    %cst_9 = arith.constant dense<2147483647> : vector<16xi32>
    %33 = vector.multi_reduction <minsi>, %32, %cst_9 [1] : vector<16x16xi32> to vector<16xi32>
    %34 = vector.shape_cast %33 : vector<16xi32> to vector<16x1xi32>
    %c1_i32 = arith.constant 1 : i32
    %35 = vector.broadcast %c1_i32 : i32 to vector<16x2xi32>
    %36 = arith.cmpi eq, %6, %35 : vector<16x2xi32>
    %37 = vector.shape_cast %34 : vector<16x1xi32> to vector<16x1xi32>
    %38 = vector.broadcast %37 : vector<16x1xi32> to vector<16x2xi32>
    %39 = arith.select %36, %38, %21 : vector<16x2xi1>, vector<16x2xi32>
    %c16_i32_10 = arith.constant 16 : i32
    %40 = vector.broadcast %c16_i32_10 : i32 to vector<16x1xi32>
    %41 = arith.addi %34, %40 : vector<16x1xi32>
    %42 = vector.broadcast %41 : vector<16x1xi32> to vector<16x32xi32>
    %43 = arith.cmpi eq, %4, %42 : vector<16x32xi32>
    %44 = arith.ori %25, %43 : vector<16x32xi1>
    %45 = arith.extui %44 : vector<16x32xi1> to vector<16x32xi32>
    %46 = arith.sitofp %45 : vector<16x32xi32> to vector<16x32xf32>
    %47 = arith.truncf %46 : vector<16x32xf32> to vector<16x32xbf16>
    %c0_11 = arith.constant 0 : index
    %c0_12 = arith.constant 0 : index
    %48 = vector.load %arg3[%c0_11, %c0_12] : memref<32x32xbf16, #tpu.memory_space<vmem>>, vector<32x32xbf16>
    %cst_13 = arith.constant dense<0.000000e+00> : vector<16x32xf32>
    %49 = tpu.matmul %47, %48, %cst_13 {dimension_numbers = #tpu.dot_dimension_numbers<[1], [0], [0], [1], [0, 0, 1, 1], [], []>} : vector<16x32xbf16>, vector<32x32xbf16>, vector<16x32xf32> -> vector<16x32xf32>
    %c0_14 = arith.constant 0 : index
    %c0_15 = arith.constant 0 : index
    %50 = vector.load %arg4[%c0_14, %c0_15] : memref<16x32xf32, #tpu.memory_space<vmem>>, vector<16x32xf32>
    tpu.vector_store %arg4[%c0_14, %c0_15], %49 {strides = array<i32>} : memref<16x32xf32, #tpu.memory_space<vmem>>, vector<16x32xf32>,
    %51 = tpu.transpose %39, [1, 0] : vector<16x2xi32> -> vector<2x16xi32>
    %c0_16 = arith.constant 0 : index
    %c0_17 = arith.constant 0 : index
    %52 = vector.load %arg5[%c0_16, %c0_17] : memref<2x16xi32, #tpu.memory_space<vmem>>, vector<2x16xi32>
    tpu.vector_store %arg5[%c0_16, %c0_17], %51 {strides = array<i32>} : memref<2x16xi32, #tpu.memory_space<vmem>>, vector<2x16xi32>,
    %53 = arith.extui %44 : vector<16x32xi1> to vector<16x32xi32>
    %54 = arith.sitofp %53 : vector<16x32xi32> to vector<16x32xf32>
    %cst_18 = arith.constant dense<0.000000e+00> : vector<32xf32>
    %55 = vector.multi_reduction <add>, %54, %cst_18 [0] : vector<16x32xf32> to vector<32xf32>
    %56 = vector.shape_cast %55 : vector<32xf32> to vector<1x32xf32>
    %c0_19 = arith.constant 0 : index
    %c0_20 = arith.constant 0 : index
    %c0_21 = arith.constant 0 : index
    %57 = vector.load %arg6[%c0_19, %c0_20, %c0_21] : memref<1x1x32xf32, #tpu.memory_space<vmem>>, vector<1x1x32xf32>
    %58 = vector.shape_cast %57 : vector<1x1x32xf32> to vector<1x32xf32>
    %59 = vector.shape_cast %56 : vector<1x32xf32> to vector<1x1x32xf32>
    tpu.vector_store %arg6[%c0_19, %c0_20, %c0_21], %59 {strides = array<i32>} : memref<1x1x32xf32, #tpu.memory_space<vmem>>, vector<1x1x32xf32>,
    return
  }
  func.func @transform_0(%arg0: i32) -> (i32, i32) {
    %c0_i32 = arith.constant 0 : i32
    %c0_i32_0 = arith.constant 0 : i32
    return %arg0, %c0_i32 : i32, i32
  }
  func.func @transform_1(%arg0: i32) -> (i32, i32) {
    %c0_i32 = arith.constant 0 : i32
    %c0_i32_0 = arith.constant 0 : i32
    %c0_i32_1 = arith.constant 0 : i32
    return %c0_i32, %c0_i32_0 : i32, i32
  }
  func.func @transform_2(%arg0: i32) -> (i32, i32) {
    %c0_i32 = arith.constant 0 : i32
    %c0_i32_0 = arith.constant 0 : i32
    %c0_i32_1 = arith.constant 0 : i32
    return %c0_i32, %c0_i32_0 : i32, i32
  }
  func.func @transform_3(%arg0: i32) -> (i32, i32) {
    %c0_i32 = arith.constant 0 : i32
    %c0_i32_0 = arith.constant 0 : i32
    return %arg0, %c0_i32 : i32, i32
  }
  func.func @transform_4(%arg0: i32) -> (i32, i32) {
    %c0_i32 = arith.constant 0 : i32
    %c0_i32_0 = arith.constant 0 : i32
    return %c0_i32, %arg0 : i32, i32
  }
  func.func @transform_5(%arg0: i32) -> (i32, i32, i32) {
    %c0_i32 = arith.constant 0 : i32
    %c0_i32_0 = arith.constant 0 : i32
    %c0_i32_1 = arith.constant 0 : i32
    return %arg0, %c0_i32, %c0_i32_0 : i32, i32, i32
  }
}

</mosaic_0001>

<llo_original>
// kernel: mq_forward.1
$region0: #{mq_forward.1}
  #allocation0 [shape = 'u32[]', space=smem, size = 0x4, offset = 0x4, fixed_abs, tag = 'smem constant byte address 0x4 - core index']
  #allocation1 [shape = 'u32[144,128]{1,0:T(1,128)}', space=vmem, size = 0x12000, scoped, tag = 'internal scratch']
  %s0 = inlined_call_operand.vmem [shape: f32[16,32], index: 0, kind: input, shape index: {}]
  %s1 = inlined_call_operand.vmem [shape: bf16[32,32], index: 1, kind: input, shape index: {}]
  %s2 = inlined_call_operand.vmem [shape: bf16[32,32], index: 2, kind: input, shape index: {}]
  %s3 = inlined_call_operand.hbm [shape: f32[16,32], index: 3, kind: output, shape index: {0}]
  %s4 = inlined_call_operand.vmem [shape: s32[2,16], index: 4, kind: output, shape index: {1}]
  %s5 = inlined_call_operand.vmem [shape: f32[1,1,32], index: 5, kind: output, shape index: {2}]
  %6 = xla_tuple %s3, %s4, %s5
  %s7 = sld [smem:[#allocation0]]
  $region38: #{mq_forward.1} parent=0
    _
  %s9 = ssub.s32 1, %s7
  %s10 = scalar_select 0, %s9, %s7
  $region1: #{mq_forward.1} parent=0
    #allocation2 [shape = 'u8[8192]{0}', space=vmem, size = 0x2000, scoped, tag = 'output window, operand 0, single buffered']
    #allocation3 [shape = 's32[1]{0}', space=sflag, size = 0x4, scoped, tag = 'scoped memory for mq_forward.1']
    %11 = vsyncpa [#allocation3], 0
    // Predicated region
    $region2: #{mq_forward.1} parent=1 // pred_check
      _
    $region3: #{mq_forward.1} parent=1 // pred_check_branch
      %13 = sbr.rel (0) target = $region5
    $region4: #{mq_forward.1} parent=1 // pred_region
      _
    $region5: #{mq_forward.1} parent=1 // pred_fallthru
      _
    // Predicated region
    $region6: #{mq_forward.1} parent=1 // pred_check
      _
    $region7: #{mq_forward.1} parent=1 // pred_check_branch
      %15 = sbr.rel (0) target = $region9
    $region8: #{mq_forward.1} parent=1 // pred_region
      _
    $region9: #{mq_forward.1} parent=1 // pred_fallthru
      _
    // Predicated region
    $region10: #{mq_forward.1} parent=1 // pred_check
      _
    $region11: #{mq_forward.1} parent=1 // pred_check_branch
      %17 = sbr.rel (0) target = $region13
    $region12: #{mq_forward.1} parent=1 // pred_region
      _
    $region13: #{mq_forward.1} parent=1 // pred_fallthru
      _
    %v19 = vld [vmem:[%s0] sm:$0xff]
    %v20 = vld [vmem:[%s0 + $0x8] sm:$0xff]
    %v21 = vpack.c.bf16 %v20, %v19
    %v22 = vld [vmem:[%s1] sm:$0xf]
    %v23 = vld [vmem:[%s1 + $0x4] sm:$0xf]
    %v24 = vld [vmem:[%s1 + $0x8] sm:$0xf]
    %v25 = vld [vmem:[%s1 + $0xc] sm:$0xf]
    %v30 = vunpack.c.l.b16 %v22
    %v31 = vunpack.c.l.b16 %v23
    %v32 = vunpack.c.l.b16 %v24
    %v33 = vunpack.c.l.b16 %v25
    %v34 = vpack.c.b16 %v31, %v30
    %v35 = vpack.c.b16 %v33, %v32
    %vm38 = vcmask 261120
    %v40 = vsel %vm38, %v21, 0
    %42 = vmatprep.subr.bf16.mxu0 0
    %43 = vmatpush1.bf16.msra.mxu0 %v34
    %44 = vmatprep.subr.bf16.mxu0 0
    %45 = vmatpush1.bf16.msra.mxu0 %v35
    %46 = vmatprep.subr.bf16.mxu0 0
    %47 = vmatpush1.bf16.msra.mxu0 0
    %48 = vmatprep.subr.bf16.mxu0 0
    %49 = vmatpush1.bf16.msra.mxu0 0
    %50 = vmatprep.subr.bf16.mxu0 0
    %51 = vmatpush1.bf16.msra.mxu0 0
    %52 = vmatprep.subr.bf16.mxu0 0
    %53 = vmatpush1.bf16.msra.mxu0 0
    %54 = vmatprep.subr.bf16.mxu0 0
    %55 = vmatpush1.bf16.msra.mxu0 0
    %56 = vmatprep.subr.bf16.mxu0 0
    %57 = vmatpush1.bf16.msra.mxu0 0
    %58 = vmatprep.subr.bf16.mxu0 0
    %59 = vmatpush1.bf16.msra.mxu0 0
    %60 = vmatprep.subr.bf16.mxu0 0
    %61 = vmatpush1.bf16.msra.mxu0 0
    %62 = vmatprep.subr.bf16.mxu0 0
    %63 = vmatpush1.bf16.msra.mxu0 0
    %64 = vmatprep.subr.bf16.mxu0 0
    %65 = vmatpush1.bf16.msra.mxu0 0
    %66 = vmatprep.subr.bf16.mxu0 0
    %67 = vmatpush1.bf16.msra.mxu0 0
    %68 = vmatprep.subr.bf16.mxu0 0
    %69 = vmatpush1.bf16.msra.mxu0 0
    %70 = vmatprep.subr.bf16.mxu0 0
    %71 = vmatpush1.bf16.msra.mxu0 0
    %72 = vmatprep.subr.bf16.mxu0 0
    %73 = vmatpush1.bf16.msra.mxu0 0
    %74 = vmatprep.mubr.bf16.mxu0 0
    %75 = vmatmul.mubr.bf16.gmra.mrb[0].mxu0 %v40
    %v76 = vpop.f32.mrb[0].mxu0
    %v77 = vadd.f32 0.0, %v76
    %v78 = vpop.f32.mrb[0].mxu0
    %v79 = vpop.f32.mrb[0].mxu0
    %v80 = vadd.f32 0.0, %v79
    %v81 = vpop.f32.mrb[0].mxu0
    %82 = vdwg.mxu0
    %v83 = vlaneseq
    %v84 = vand.u32 %v83, 127
    %vm85 = vcmask 130048
    %v86 = vsel %vm85, %v77, -inf
    %87 = vmax.xlane.f32.xlu0 %v86
    %v88 = vpop.xlane.xlu0 %87
    %v89 = vsel %vm85, %v80, -inf
    %90 = vmax.xlane.f32.xlu0 %v89
    %v91 = vpop.xlane.xlu0 %90
    %vm92 = vcmp.eq.f32.partialorder %v77, %v88
    %vm93 = vcmp.eq.f32.partialorder %v80, %v91
    %v94 = vsel %vm92, %v84, 16
    %v95 = vsel %vm93, %v84, 16
    %v96 = vsel %vm85, %v94, 2147483647
    %v97 = vand.u32 %v96, 65535
    %v98 = vshra.s32 %v96, 16
    %v99 = vcvt.s32.f32 %v97
    %v100 = vcvt.s32.f32 %v98
    %101 = vmin.xlane.f32.xlu0 %v100
    %v102 = vpop.xlane.xlu0 %101
    %vm103 = vcmp.eq.f32.partialorder %v100, %v102
    %v104 = vsel %vm103, %v99, inf
    %105 = vmin.xlane.f32.xlu0 %v104
    %v106 = vpop.xlane.xlu0 %105
    %v107 = vcvt.f32.s32 %v106
    %v108 = vcvt.f32.s32 %v102
    %v109 = vshll.u32 %v108, 16
    %v110 = vadd.s32 %v109, %v107
    %v111 = vsel %vm85, %v95, 2147483647
    %v112 = vand.u32 %v111, 65535
    %v113 = vshra.s32 %v111, 16
    %v114 = vcvt.s32.f32 %v112
    %v115 = vcvt.s32.f32 %v113
    %116 = vmin.xlane.f32.xlu0 %v115
    %v117 = vpop.xlane.xlu0 %116
    %vm118 = vcmp.eq.f32.partialorder %v115, %v117
    %v119 = vsel %vm118, %v114, inf
    %120 = vmin.xlane.f32.xlu0 %v119
    %v121 = vpop.xlane.xlu0 %120
    %v122 = vcvt.f32.s32 %v121
    %v123 = vcvt.f32.s32 %v117
    %v124 = vshll.u32 %v123, 16
    %v125 = vadd.s32 %v124, %v122
    %vm126 = vcmp.eq.s32.totalorder %v84, 0
    %v127 = vsel %vm126, %v110, 0
    %v128 = vsel %vm126, %v125, 0
    %vm129 = vcmp.eq.s32.totalorder %v84, %v110
    %vm130 = vcmp.eq.s32.totalorder %v84, %v125
    %vm131 = vcmask 261248
    %v132 = vsel %vm131, %v77, -inf
    %133 = vmax.xlane.f32.xlu0 %v132
    %v134 = vpop.xlane.xlu0 %133
    %v135 = vsel %vm131, %v80, -inf
    %136 = vmax.xlane.f32.xlu0 %v135
    %v137 = vpop.xlane.xlu0 %136
    %vm138 = vcmp.eq.f32.partialorder %v77, %v134
    %vm139 = vcmp.eq.f32.partialorder %v80, %v137
    %140 = vrot.lane.b32.xlu0 %v84, 16
    %v141 = vpop.permute.xlu0 %140
    %v142 = vsel %vm138, %v141, 16
    %v143 = vsel %vm139, %v141, 16
    %v144 = vsel %vm131, %v142, 2147483647
    %v145 = vand.u32 %v144, 65535
    %v146 = vshra.s32 %v144, 16
    %v147 = vcvt.s32.f32 %v145
    %v148 = vcvt.s32.f32 %v146
    %149 = vmin.xlane.f32.xlu0 %v148
    %v150 = vpop.xlane.xlu0 %149
    %vm151 = vcmp.eq.f32.partialorder %v148, %v150
    %v152 = vsel %vm151, %v147, inf
    %153 = vmin.xlane.f32.xlu0 %v152
    %v154 = vpop.xlane.xlu0 %153
    %v155 = vcvt.f32.s32 %v154
    %v156 = vcvt.f32.s32 %v150
    %v157 = vshll.u32 %v156, 16
    %v158 = vadd.s32 %v157, %v155
    %v159 = vsel %vm131, %v143, 2147483647
    %v160 = vand.u32 %v159, 65535
    %v161 = vshra.s32 %v159, 16
    %v162 = vcvt.s32.f32 %v160
    %v163 = vcvt.s32.f32 %v161
    %164 = vmin.xlane.f32.xlu0 %v163
    %v165 = vpop.xlane.xlu0 %164
    %vm166 = vcmp.eq.f32.partialorder %v163, %v165
    %v167 = vsel %vm166, %v162, inf
    %168 = vmin.xlane.f32.xlu0 %v167
    %v169 = vpop.xlane.xlu0 %168
    %v170 = vcvt.f32.s32 %v169
    %v171 = vcvt.f32.s32 %v165
    %v172 = vshll.u32 %v171, 16
    %v173 = vadd.s32 %v172, %v170
    %vm174 = vcmp.eq.s32.totalorder %v84, 1
    %v175 = vsel %vm174, %v158, %v127
    %v176 = vsel %vm174, %v173, %v128
    %v177 = vadd.s32 %v158, 16
    %v178 = vadd.s32 %v173, 16
    %vm179 = vcmp.eq.s32.totalorder %v84, %v177
    %vm180 = vcmp.eq.s32.totalorder %v84, %v178
    %vm181 = vmor %vm129, %vm179
    %vm182 = vmor %vm130, %vm180
    %v183 = vsel %vm181, 1, 0
    %v184 = vsel %vm182, 1, 0
    %v185 = vcvt.s32.f32 %v183
    %v186 = vcvt.s32.f32 %v184
    %v187 = vpack.c.bf16 %v186, %v185
    %v188 = vld [vmem:[%s2] sm:$0xf]
    %v189 = vld [vmem:[%s2 + $0x4] sm:$0xf]
    %v190 = vld [vmem:[%s2 + $0x8] sm:$0xf]
    %v191 = vld [vmem:[%s2 + $0xc] sm:$0xf]
    %v196 = vunpack.c.l.b16 %v188
    %v197 = vunpack.c.l.b16 %v189
    %v198 = vunpack.c.l.b16 %v190
    %v199 = vunpack.c.l.b16 %v191
    %v200 = vpack.c.b16 %v197, %v196
    %v201 = vpack.c.b16 %v199, %v198
    %v205 = vsel %vm38, %v187, 0
    %207 = vmatprep.subr.bf16.mxu0 0
    %208 = vmatpush1.bf16.msra.mxu0 %v200
    %209 = vmatprep.subr.bf16.mxu0 0
    %210 = vmatpush1.bf16.msra.mxu0 %v201
    %211 = vmatprep.subr.bf16.mxu0 0
    %212 = vmatpush1.bf16.msra.mxu0 0
    %213 = vmatprep.subr.bf16.mxu0 0
    %214 = vmatpush1.bf16.msra.mxu0 0
    %215 = vmatprep.subr.bf16.mxu0 0
    %216 = vmatpush1.bf16.msra.mxu0 0
    %217 = vmatprep.subr.bf16.mxu0 0
    %218 = vmatpush1.bf16.msra.mxu0 0
    %219 = vmatprep.subr.bf16.mxu0 0
    %220 = vmatpush1.bf16.msra.mxu0 0
    %221 = vmatprep.subr.bf16.mxu0 0
    %222 = vmatpush1.bf16.msra.mxu0 0
    %223 = vmatprep.subr.bf16.mxu0 0
    %224 = vmatpush1.bf16.msra.mxu0 0
    %225 = vmatprep.subr.bf16.mxu0 0
    %226 = vmatpush1.bf16.msra.mxu0 0
    %227 = vmatprep.subr.bf16.mxu0 0
    %228 = vmatpush1.bf16.msra.mxu0 0
    %229 = vmatprep.subr.bf16.mxu0 0
    %230 = vmatpush1.bf16.msra.mxu0 0
    %231 = vmatprep.subr.bf16.mxu0 0
    %232 = vmatpush1.bf16.msra.mxu0 0
    %233 = vmatprep.subr.bf16.mxu0 0
    %234 = vmatpush1.bf16.msra.mxu0 0
    %235 = vmatprep.subr.bf16.mxu0 0
    %236 = vmatpush1.bf16.msra.mxu0 0
    %237 = vmatprep.subr.bf16.mxu0 0
    %238 = vmatpush1.bf16.msra.mxu0 0
    %239 = vmatprep.mubr.bf16.mxu0 0
    %240 = vmatmul.mubr.bf16.gmra.mrb[0].mxu0 %v205
    %v241 = vpop.f32.mrb[0].mxu0
    %v242 = vadd.f32 0.0, %v241
    %v243 = vpop.f32.mrb[0].mxu0
    %v244 = vpop.f32.mrb[0].mxu0
    %v245 = vadd.f32 0.0, %v244
    %v246 = vpop.f32.mrb[0].mxu0
    %247 = vdwg.mxu0
    %248 = vst.msk [vmem:[#allocation2] sm:$0xff] %vm38, %v242
    %249 = vst.msk [vmem:[#allocation2 + $0x8] sm:$0xff] %vm38, %v245
    %250 = vxpose.xlu0.b32.start [1/16] %v175, 128
    %251 = vxpose.xlu0.b32.cont [2/16] %v176, 128
    %252 = vxpose.xlu0.b32.cont [3/16] 0, 128
    %253 = vxpose.xlu0.b32.cont [4/16] 0, 128
    %254 = vxpose.xlu0.b32.cont [5/16] 0, 128
    %255 = vxpose.xlu0.b32.cont [6/16] 0, 128
    %256 = vxpose.xlu0.b32.cont [7/16] 0, 128
    %257 = vxpose.xlu0.b32.cont [8/16] 0, 128
    %258 = vxpose.xlu0.b32.cont [9/16] 0, 128
    %259 = vxpose.xlu0.b32.cont [10/16] 0, 128
    %260 = vxpose.xlu0.b32.cont [11/16] 0, 128
    %261 = vxpose.xlu0.b32.cont [12/16] 0, 128
    %262 = vxpose.xlu0.b32.cont [13/16] 0, 128
    %263 = vxpose.xlu0.b32.cont [14/16] 0, 128
    %264 = vxpose.xlu0.b32.cont [15/16] 0, 128
    %265 = vxpose.xlu0.b32.end [16/16] 0, 128
    %v266 = vpop.trf.xlu0
    %v267 = vpop.trf.xlu0
    %v268 = vpop.trf.xlu0
    %v269 = vpop.trf.xlu0
    %v270 = vpop.trf.xlu0
    %v271 = vpop.trf.xlu0
    %v272 = vpop.trf.xlu0
    %v273 = vpop.trf.xlu0
    %v274 = vpop.trf.xlu0
    %v275 = vpop.trf.xlu0
    %v276 = vpop.trf.xlu0
    %v277 = vpop.trf.xlu0
    %v278 = vpop.trf.xlu0
    %v279 = vpop.trf.xlu0
    %v280 = vpop.trf.xlu0
    %v281 = vpop.trf.xlu0
    %vm282 = vcmask 123904
    %283 = vst.msk [vmem:[%s4] sm:$0x3] %vm282, %v266
    %v284 = vsel %vm38, %v185, 0.0
    %v285 = vsel %vm38, %v186, 0.0
    %v286 = vadd.f32 %v284, %v285
    %v287 = vrot.slane %v286, 4
    %v288 = vadd.f32 %v286, %v287
    %v289 = vrot.slane %v288, 2
    %v290 = vadd.f32 %v288, %v289
    %v291 = vrot.slane %v290, 1
    %v292 = vadd.f32 %v290, %v291
    %vm293 = vcmask 253952
    %294 = vst.msk [vmem:[%s5] sm:$0x1] %vm293, %v292
    // Predicated region
    $region14: #{mq_forward.1} parent=1 // pred_check
      _
    $region15: #{mq_forward.1} parent=1 // pred_check_branch
      %296 = sbr.rel (0) target = $region17
    $region16: #{mq_forward.1} parent=1 // pred_region
      %s298 = ssub.s32 256, 256
      %299 = vsyncadd [#allocation3], %s298
      %s300 = sshll.u32 [#allocation2], 4
      %s301 = int_to_ptr.vmem [resolvable:$true] %s300
      %306 = dma.vmem_to_hbm [thread:$0]  %s301, 256, %s3, [#allocation3], 128, 128, 8
    $region17: #{mq_forward.1} parent=1 // pred_fallthru
      _
    // Predicated region
    $region18: #{mq_forward.1} parent=1 // pred_check
      _
    $region19: #{mq_forward.1} parent=1 // pred_check_branch
      %308 = sbr.rel (0) target = $region21
    $region20: #{mq_forward.1} parent=1 // pred_region
      _
    $region21: #{mq_forward.1} parent=1 // pred_fallthru
      _
    // Predicated region
    $region22: #{mq_forward.1} parent=1 // pred_check
      _
    $region23: #{mq_forward.1} parent=1 // pred_check_branch
      %310 = sbr.rel (0) target = $region25
    $region24: #{mq_forward.1} parent=1 // pred_region
      _
    $region25: #{mq_forward.1} parent=1 // pred_fallthru
      _
    // Predicated region
    $region26: #{mq_forward.1} parent=1 // pred_check
      _
    $region27: #{mq_forward.1} parent=1 // pred_check_branch
      %312 = sbr.rel (0) target = $region29
    $region28: #{mq_forward.1} parent=1 // pred_region
      %313 = dma.done [#allocation3], 256
    $region29: #{mq_forward.1} parent=1 // pred_fallthru
      _
    // Predicated region
    $region30: #{mq_forward.1} parent=1 // pred_check
      _
    $region31: #{mq_forward.1} parent=1 // pred_check_branch
      %315 = sbr.rel (0) target = $region33
    $region32: #{mq_forward.1} parent=1 // pred_region
      _
    $region33: #{mq_forward.1} parent=1 // pred_fallthru
      _
    // Predicated region
    $region34: #{mq_forward.1} parent=1 // pred_check
      _
    $region35: #{mq_forward.1} parent=1 // pred_check_branch
      %317 = sbr.rel (0) target = $region37
    $region36: #{mq_forward.1} parent=1 // pred_region
      _
    $region37: #{mq_forward.1} parent=1 // pred_fallthru
      _
    %318 = vsyncpa [#allocation3], 1

</llo_original>
